<compile_context>
chip_gen: v7x
topology: tpu7x:2x2x1
jax: 0.10.0
libtpu: 0.0.40
codegen_flags: <defaults>
</compile_context>

<pallas_src>
import jax
import jax.numpy as jnp
from jax.experimental import pallas as pl
from jax.experimental.pallas import tpu as pltpu


def attention_kernel(latent_ref, hidden_ref, wl_ref, wh_ref, bias_ref, wj_ref,
                     out_ref):
    # latent_ref : (b_blk * S, L) f32  (flattened rows of this batch block)
    # hidden_ref : (b_blk, H)     f32
    # wl_ref     : (L, A) f32,  wh_ref: (H, A) f32   (cast to bf16 in-kernel)
    # bias_ref   : (1, A) f32   (bl + bh folded)
    # wj_ref     : (1, A) f32   (joint_attention weight, lane-dense)
    # out_ref    : (b_blk, S) f32
    n_b, seq = out_ref.shape

    # Linear(latent_dim -> attention_dim): cast to bf16 on the VPU immediately
    # before the MXU dot (free in a mem-bound kernel), accumulate in f32.
    latent_att = jnp.dot(latent_ref[...].astype(jnp.bfloat16),
                         wl_ref[...].astype(jnp.bfloat16),
                         preferred_element_type=jnp.float32)       # (n_b*S, A)

    # Linear(hidden_dim -> attention_dim) on h_t, both linear biases folded.
    hidden_att = jnp.dot(hidden_ref[...].astype(jnp.bfloat16),
                         wh_ref[...].astype(jnp.bfloat16),
                         preferred_element_type=jnp.float32) + bias_ref[...]  # (n_b, A)

    # Broadcast the per-batch hidden term to every sequence row (sublane
    # repeat of a small tensor) and keep all block-sized f32 math 2-D.
    hidden_rep = jnp.repeat(hidden_att, seq, axis=0)               # (n_b*S, A)
    act = jnp.maximum(latent_att + hidden_rep, 0.0)                # relu

    # joint_attention(...).squeeze(-1): weighted lane-reduce over A.
    # bj dropped: softmax over S is invariant to a per-row constant shift.
    joint_col = jnp.sum(act * wj_ref[...], axis=-1, keepdims=True)  # (n_b*S, 1)
    joint = joint_col.reshape(n_b, seq)                             # small reshape

    # softmax over the sequence dimension (fully inside this block), exact
    # normalization (divide) so rows sum to 1 to f32 precision.
    m = jnp.max(joint, axis=-1, keepdims=True)
    e = jnp.exp(joint - m)
    denom = jnp.sum(e, axis=-1, keepdims=True)
    out_ref[...] = (e / denom).astype(out_ref.dtype)


def _round_up(x, m):
    return ((x + m - 1) // m) * m


def _vmem_capacity_bytes():
    """Per-core VMEM capacity; conservative 64 MiB (v7x per-TC) fallback."""
    try:
        return int(pltpu.get_tpu_info().vmem_capacity_bytes)
    except Exception:
        return 64 << 20


def _valid_block_batches(B):
    # (b_blk, S) output block needs b_blk % 8 == 0 (or the full batch); all
    # other operands are 8-aligned via S or use full-extent blocks.
    return [d for d in range(1, B + 1) if B % d == 0 and (d % 8 == 0 or d == B)]


def _pick_block_batch(B, S, L, H, A, vmem_cap):
    """Pick batch rows per grid step so the *whole* live working set (f32
    latent block x2 buffers, in-kernel bf16 copy, f32 intermediates, hidden,
    output, weights) stays well inside VMEM on every generation."""
    Lp = _round_up(max(L, 1), 128)
    Ap = _round_up(max(A, 1), 128)
    Hp = _round_up(max(H, 1), 128)
    Sp = _round_up(max(S, 1), 8)
    per_row = (
        Sp * Lp * 4 * 2          # f32 latent block, double-buffered
        + Sp * Lp * 2            # in-kernel bf16 cast of the latent block
        + 2 * Sp * Ap * 4        # latent_att + relu result (f32)
        + Sp * Ap * 4            # broadcast hidden term (may materialize)
        + Hp * 4 * 2             # hidden block, double-buffered
        + _round_up(S, 128) * 4 * 2   # output block, double-buffered
    )
    fixed = (Lp + Hp + 2) * Ap * 4 * 2 + (1 << 20)   # weights/biases + slack
    budget = int(vmem_cap * 0.55) - fixed            # headroom for compiler scratch
    target = max(1, budget // max(per_row, 1))
    valid = _valid_block_batches(B)
    fitting = [d for d in valid if d <= target]
    return max(fitting) if fitting else min(valid)


def attention_forward(latent, h_t, wl, bl, wh, bh, wj, *, block_batch=None):
    """latent: (B, S, L) f32; h_t: (B, 1, H) f32 or None (zeros, as in torch).
    Weights are stored as (in_dim, out_dim) = torch Linear weight transposed;
    wj is (1, A).  The joint bias bj is mathematically dead (softmax shift
    invariance) and is not an input to the kernel."""
    B, S, L = latent.shape
    A = wl.shape[1]
    H = wh.shape[0]
    if h_t is None:
        h_t = jnp.zeros((B, 1, H), latent.dtype)

    vmem_cap = _vmem_capacity_bytes()
    if block_batch is not None:
        b_blk = int(block_batch)
        if B % b_blk != 0 or (b_blk % 8 != 0 and b_blk != B):
            b_blk = _pick_block_batch(B, S, L, H, A, vmem_cap)
    else:
        b_blk = _pick_block_batch(B, S, L, H, A, vmem_cap)
    grid = (B // b_blk,)

    # Wrapper-side work is layout plumbing on tiny tensors only; the big
    # latent tensor is NOT copied/cast here (contiguous reshape is free).
    latent2d = latent.reshape(B * S, L)                    # no extra HBM pass
    hidden2d = h_t.reshape(B, H)                           # tiny
    bias = (bl + bh).astype(jnp.float32)                   # (1, A), tiny
    wj_row = wj.reshape(1, A).astype(jnp.float32)          # (1, A), tiny

    # >16 MiB default scoped limit on v5e, ~96 MiB on v6e, <=48 MiB on v7x.
    vmem_limit = int(min(vmem_cap * 0.75, 100 * (1 << 20)))

    return pl.pallas_call(
        attention_kernel,
        out_shape=jax.ShapeDtypeStruct((B, S), jnp.float32),
        grid=grid,
        in_specs=[
            # batch-blocked activations (double-buffered by the pipeline)
            pl.BlockSpec((b_blk * S, L), lambda i: (i, 0)),
            pl.BlockSpec((b_blk, H), lambda i: (i, 0)),
            # weights / bias: constant index maps -> VMEM-resident across steps
            pl.BlockSpec((L, A), lambda i: (0, 0)),
            pl.BlockSpec((H, A), lambda i: (0, 0)),
            pl.BlockSpec((1, A), lambda i: (0, 0)),
            pl.BlockSpec((1, A), lambda i: (0, 0)),
        ],
        out_specs=pl.BlockSpec((b_blk, S), lambda i: (i, 0)),
        compiler_params=pltpu.CompilerParams(
            dimension_semantics=("parallel",),
            vmem_limit_bytes=vmem_limit),
    )(latent2d, hidden2d, wl, wh, bias, wj_row)


def reference_forward(latent, hidden, wl, bl, wh, bh, wj, bj, cast_bf16=False):
    """Pure-JAX mirror of the PyTorch module (includes the dead bj term)."""
    cast = (lambda x: x.astype(jnp.bfloat16)) if cast_bf16 else (lambda x: x)
    B, S, L = latent.shape
    la = jnp.dot(cast(latent).reshape(B * S, L), cast(wl),
                 preferred_element_type=jnp.float32).reshape(B, S, -1) + bl
    ha = jnp.dot(cast(jnp.squeeze(hidden, axis=1)), cast(wh),
                 preferred_element_type=jnp.float32) + bh
    j = jnp.sum(jnp.maximum(la + ha[:, None, :], 0.0) * wj.reshape(1, 1, -1),
                axis=-1) + bj[0, 0]
    return jax.nn.softmax(j, axis=-1)


if __name__ == "__main__":
    B, S = 16, 8
    latent_dim, hidden_dim, attention_dim = 32, 16, 32

    key = jax.random.PRNGKey(0)
    k = jax.random.split(key, 8)

    # Deterministic parameter init (Linear weights stored as (in_dim, out_dim)).
    wl = jax.random.normal(k[0], (latent_dim, attention_dim), jnp.float32) * 0.1
    bl = jax.random.normal(k[1], (1, attention_dim), jnp.float32) * 0.1
    wh = jax.random.normal(k[2], (hidden_dim, attention_dim), jnp.float32) * 0.1
    bh = jax.random.normal(k[3], (1, attention_dim), jnp.float32) * 0.1
    wj = jax.random.normal(k[4], (1, attention_dim), jnp.float32) * 0.1
    bj = jax.random.normal(k[5], (1, 1), jnp.float32) * 0.1

    # Inputs: latent_repr (B, S, L); h_t = hidden_repr[0] with shape (B, 1, H).
    latent_repr = jax.random.normal(k[6], (B, S, latent_dim), jnp.float32)
    h_t = jax.random.normal(k[7], (B, 1, hidden_dim), jnp.float32)

    # block_batch=8 -> grid=(2,): exercises multi-step pipelining and weight
    # residency across grid steps.
    out = attention_forward(latent_repr, h_t, wl, bl, wh, bh, wj, block_batch=8)
    out = jax.block_until_ready(out)

    ref_bf16 = reference_forward(latent_repr, h_t, wl, bl, wh, bh, wj, bj,
                                 cast_bf16=True)
    ref_f32 = reference_forward(latent_repr, h_t, wl, bl, wh, bh, wj, bj,
                                cast_bf16=False)

    assert out.shape == (B, S)
    assert jnp.allclose(jnp.sum(out, axis=-1), 1.0, atol=1e-5), \
        "softmax rows must sum to 1"
    assert jnp.allclose(out, ref_bf16, atol=5e-3, rtol=5e-3), \
        "mismatch vs bf16-matmul JAX reference"
    assert jnp.allclose(out, ref_f32, atol=3e-2, rtol=3e-2), \
        "mismatch vs full-f32 JAX reference"

    print("KERNEL_OK")
</pallas_src>

<mosaic_0001>
module attributes {stable_mosaic.version = 11 : i64} {
  func.func @attention_kernel(%arg0: i32, %arg1: memref<64x32xf32, #tpu.memory_space<vmem>>, %arg2: memref<8x16xf32, #tpu.memory_space<vmem>>, %arg3: memref<32x32xf32, #tpu.memory_space<vmem>>, %arg4: memref<16x32xf32, #tpu.memory_space<vmem>>, %arg5: memref<1x32xf32, #tpu.memory_space<vmem>>, %arg6: memref<1x32xf32, #tpu.memory_space<vmem>>, %arg7: memref<8x8xf32, #tpu.memory_space<vmem>>) attributes {dimension_semantics = [#tpu.dimension_semantics<parallel>], iteration_bounds = array<i64: 2>, scalar_prefetch = 0 : i64, scratch_operands = 0 : i64, tpu.core_type = #tpu.core_type<tc>, window_params = [{transform_indices = @transform_0, window_bounds = array<i64: 64, 32>}, {transform_indices = @transform_1, window_bounds = array<i64: 8, 16>}, {pipeline_mode = #tpu.pipeline_mode<synchronous>, transform_indices = @transform_2, window_bounds = array<i64: 32, 32>}, {pipeline_mode = #tpu.pipeline_mode<synchronous>, transform_indices = @transform_3, window_bounds = array<i64: 16, 32>}, {pipeline_mode = #tpu.pipeline_mode<synchronous>, transform_indices = @transform_4, window_bounds = array<i64: 1, 32>}, {pipeline_mode = #tpu.pipeline_mode<synchronous>, transform_indices = @transform_5, window_bounds = array<i64: 1, 32>}, {transform_indices = @transform_6, window_bounds = array<i64: 8, 8>}]} {
    %c0 = arith.constant 0 : index
    %c0_0 = arith.constant 0 : index
    %0 = vector.load %arg1[%c0, %c0_0] : memref<64x32xf32, #tpu.memory_space<vmem>>, vector<64x32xf32>
    %1 = arith.truncf %0 : vector<64x32xf32> to vector<64x32xbf16>
    %c0_1 = arith.constant 0 : index
    %c0_2 = arith.constant 0 : index
    %2 = vector.load %arg3[%c0_1, %c0_2] : memref<32x32xf32, #tpu.memory_space<vmem>>, vector<32x32xf32>
    %3 = arith.truncf %2 : vector<32x32xf32> to vector<32x32xbf16>
    %cst = arith.constant dense<0.000000e+00> : vector<64x32xf32>
    %4 = tpu.matmul %1, %3, %cst {dimension_numbers = #tpu.dot_dimension_numbers<[1], [0], [0], [1], [0, 0, 1, 1], [], []>} : vector<64x32xbf16>, vector<32x32xbf16>, vector<64x32xf32> -> vector<64x32xf32>
    %c0_3 = arith.constant 0 : index
    %c0_4 = arith.constant 0 : index
    %5 = vector.load %arg2[%c0_3, %c0_4] : memref<8x16xf32, #tpu.memory_space<vmem>>, vector<8x16xf32>
    %6 = arith.truncf %5 : vector<8x16xf32> to vector<8x16xbf16>
    %c0_5 = arith.constant 0 : index
    %c0_6 = arith.constant 0 : index
    %7 = vector.load %arg4[%c0_5, %c0_6] : memref<16x32xf32, #tpu.memory_space<vmem>>, vector<16x32xf32>
    %8 = arith.truncf %7 : vector<16x32xf32> to vector<16x32xbf16>
    %cst_7 = arith.constant dense<0.000000e+00> : vector<8x32xf32>
    %9 = tpu.matmul %6, %8, %cst_7 {dimension_numbers = #tpu.dot_dimension_numbers<[1], [0], [0], [1], [0, 0, 1, 1], [], []>} : vector<8x16xbf16>, vector<16x32xbf16>, vector<8x32xf32> -> vector<8x32xf32>
    %c0_8 = arith.constant 0 : index
    %c0_9 = arith.constant 0 : index
    %10 = vector.load %arg5[%c0_8, %c0_9] : memref<1x32xf32, #tpu.memory_space<vmem>>, vector<1x32xf32>
    %11 = vector.broadcast %10 : vector<1x32xf32> to vector<8x32xf32>
    %12 = arith.addf %9, %11 : vector<8x32xf32>
    %13 = vector.shape_cast %12 : vector<8x32xf32> to vector<8x1x32xf32>
    %14 = vector.broadcast %13 : vector<8x1x32xf32> to vector<8x8x32xf32>
    %15 = vector.shape_cast %14 : vector<8x8x32xf32> to vector<64x32xf32>
    %16 = arith.addf %4, %15 : vector<64x32xf32>
    %cst_10 = arith.constant 0.000000e+00 : f32
    %17 = vector.broadcast %cst_10 : f32 to vector<64x32xf32>
    %18 = arith.maximumf %16, %17 : vector<64x32xf32>
    %c0_11 = arith.constant 0 : index
    %c0_12 = arith.constant 0 : index
    %19 = vector.load %arg6[%c0_11, %c0_12] : memref<1x32xf32, #tpu.memory_space<vmem>>, vector<1x32xf32>
    %20 = vector.broadcast %19 : vector<1x32xf32> to vector<64x32xf32>
    %21 = arith.mulf %18, %20 : vector<64x32xf32>
    %cst_13 = arith.constant dense<0.000000e+00> : vector<64xf32>
    %22 = vector.multi_reduction <add>, %21, %cst_13 [1] : vector<64x32xf32> to vector<64xf32>
    %23 = vector.shape_cast %22 : vector<64xf32> to vector<64x1xf32>
    %24 = vector.shape_cast %23 : vector<64x1xf32> to vector<8x8xf32>
    %cst_14 = arith.constant dense<0xFF800000> : vector<8xf32>
    %25 = vector.multi_reduction <maximumf>, %24, %cst_14 [1] : vector<8x8xf32> to vector<8xf32>
    %26 = vector.shape_cast %25 : vector<8xf32> to vector<8x1xf32>
    %27 = vector.broadcast %26 : vector<8x1xf32> to vector<8x8xf32>
    %28 = arith.subf %24, %27 : vector<8x8xf32>
    %29 = math.exp %28 : vector<8x8xf32>
    %cst_15 = arith.constant dense<0.000000e+00> : vector<8xf32>
    %30 = vector.multi_reduction <add>, %29, %cst_15 [1] : vector<8x8xf32> to vector<8xf32>
    %31 = vector.shape_cast %30 : vector<8xf32> to vector<8x1xf32>
    %32 = vector.broadcast %31 : vector<8x1xf32> to vector<8x8xf32>
    %33 = arith.divf %29, %32 : vector<8x8xf32>
    %c0_16 = arith.constant 0 : index
    %c0_17 = arith.constant 0 : index
    %34 = vector.load %arg7[%c0_16, %c0_17] : memref<8x8xf32, #tpu.memory_space<vmem>>, vector<8x8xf32>
    tpu.vector_store %arg7[%c0_16, %c0_17], %33 {strides = array<i32>} : memref<8x8xf32, #tpu.memory_space<vmem>>, vector<8x8xf32>,
    return
  }
  func.func @transform_0(%arg0: i32) -> (i32, i32) {
    %c0_i32 = arith.constant 0 : i32
    %c0_i32_0 = arith.constant 0 : i32
    return %arg0, %c0_i32 : i32, i32
  }
  func.func @transform_1(%arg0: i32) -> (i32, i32) {
    %c0_i32 = arith.constant 0 : i32
    %c0_i32_0 = arith.constant 0 : i32
    return %arg0, %c0_i32 : i32, i32
  }
  func.func @transform_2(%arg0: i32) -> (i32, i32) {
    %c0_i32 = arith.constant 0 : i32
    %c0_i32_0 = arith.constant 0 : i32
    %c0_i32_1 = arith.constant 0 : i32
    return %c0_i32, %c0_i32_0 : i32, i32
  }
  func.func @transform_3(%arg0: i32) -> (i32, i32) {
    %c0_i32 = arith.constant 0 : i32
    %c0_i32_0 = arith.constant 0 : i32
    %c0_i32_1 = arith.constant 0 : i32
    return %c0_i32, %c0_i32_0 : i32, i32
  }
  func.func @transform_4(%arg0: i32) -> (i32, i32) {
    %c0_i32 = arith.constant 0 : i32
    %c0_i32_0 = arith.constant 0 : i32
    %c0_i32_1 = arith.constant 0 : i32
    return %c0_i32, %c0_i32_0 : i32, i32
  }
  func.func @transform_5(%arg0: i32) -> (i32, i32) {
    %c0_i32 = arith.constant 0 : i32
    %c0_i32_0 = arith.constant 0 : i32
    %c0_i32_1 = arith.constant 0 : i32
    return %c0_i32, %c0_i32_0 : i32, i32
  }
  func.func @transform_6(%arg0: i32) -> (i32, i32) {
    %c0_i32 = arith.constant 0 : i32
    %c0_i32_0 = arith.constant 0 : i32
    return %arg0, %c0_i32 : i32, i32
  }
}

</mosaic_0001>

<llo_original>
// kernel: tpu_custom_call.1
$region0: #{tpu_custom_call.1}
  #allocation0 [shape = 'u32[]', space=smem, size = 0x4, offset = 0x4, fixed_abs, tag = 'smem constant byte address 0x4 - core index']
  #allocation1 [shape = 'u32[144,128]{1,0:T(1,128)}', space=vmem, size = 0x12000, scoped, tag = 'internal scratch']
  %s0 = inlined_call_operand.vmem [shape: f32[128,32], index: 0, kind: input, shape index: {}]
  %s1 = inlined_call_operand.vmem [shape: f32[16,16], index: 1, kind: input, shape index: {}]
  %s2 = inlined_call_operand.vmem [shape: f32[32,32], index: 2, kind: input, shape index: {}]
  %s3 = inlined_call_operand.vmem [shape: f32[16,32], index: 3, kind: input, shape index: {}]
  %s4 = inlined_call_operand.vmem [shape: f32[1,32], index: 4, kind: input, shape index: {}]
  %s5 = inlined_call_operand.vmem [shape: f32[1,32], index: 5, kind: input, shape index: {}]
  %s6 = inlined_call_operand.vmem [shape: f32[16,8], index: 6, kind: output, shape index: {}]
  %s7 = sld [smem:[#allocation0]]
  $region57: #{tpu_custom_call.1} parent=0
    _
  %s9 = ssub.s32 1, %s7
  %s10 = scalar_select 0, %s9, %s7
  loop: start=0, step=1, limit=4
  $region2: #{tpu_custom_call.1} parent=0 // loop_pre_header
    _
  $region3: #{tpu_custom_call.1} parent=0 // loop_header
    %s12 = sphi 0, %s16
    %p13 = scmp.ge.s32.totalorder %s12, 4
    %s22 = sphi 0, %s24
    %s25 = sphi 0, %s22
    %s26 = sphi 0, %s25
    %s42 = sphi 0, %s26
    %s48 = sphi 0, %s50
    %s51 = sphi 0, %s48
    %s52 = sphi 0, %s51
    %s68 = sphi 0, %s52
    %s72 = sphi 0, %s72
    %s74 = sphi 0, %s72
    %s75 = sphi 0, %s74
    %s89 = sphi 0, %s75
    %s93 = sphi 0, %s93
    %s95 = sphi 0, %s93
    %s96 = sphi 0, %s95
    %s110 = sphi 0, %s96
    %s114 = sphi 0, %s114
    %s116 = sphi 0, %s114
    %s117 = sphi 0, %s116
    %s131 = sphi 0, %s117
    %s135 = sphi 0, %s135
    %s137 = sphi 0, %s135
    %s138 = sphi 0, %s137
    %s152 = sphi 0, %s138
    %s158 = sphi 0, %s160
    %s161 = sphi 0, %s158
    %s162 = sphi 0, %s161
    %s178 = sphi 0, %s162
  $region4: #{tpu_custom_call.1} parent=0 // loop_header_branch
    %15 = sbr.rel (%p13) target = $region8
  $region5: #{tpu_custom_call.1} parent=0 // loop_body
    %s17 = ssub.s32 %s12, 1
    %s18 = ssub.s32 %s12, 2
    %s19 = sadd.s32 %s12, 1
    %s20 = ssub.s32 %s12, %s19
    %p21 = scmp.eq.s32.totalorder %s20, 0
    %s23 = sadd.s32 %s22, 1
    %s24 = scalar_select %p21, %s22, %s23
    %p27 = pneg %p21
    %p28 = scmp.eq.s32.totalorder %s12, 1
    %p29 = por %p27, %p28
    %p30 = scmp.ne.s32.totalorder %s22, %s25
    %p31 = scmp.eq.s32.totalorder %s12, 0
    %p32 = por %p30, %p31
    %p33 = scmp.ne.s32.totalorder %s22, %s25
    %p34 = scmp.eq.s32.totalorder %s17, 1
    %p35 = por %p33, %p34
    %p36 = scmp.ne.s32.totalorder %s25, %s26
    %p37 = scmp.eq.s32.totalorder %s17, 0
    %p38 = por %p36, %p37
    %p39 = scmp.ne.s32.totalorder %s25, %s26
    %p40 = scmp.eq.s32.totalorder %s18, 1
    %p41 = por %p39, %p40
    %p43 = scmp.ne.s32.totalorder %s26, %s42
    %p44 = scmp.eq.s32.totalorder %s18, 0
    %p45 = por %p43, %p44
    %s46 = ssub.s32 %s12, %s19
    %p47 = scmp.eq.s32.totalorder %s46, 0
    %s49 = sadd.s32 %s48, 1
    %s50 = scalar_select %p47, %s48, %s49
    %p53 = pneg %p47
    %p54 = scmp.eq.s32.totalorder %s12, 1
    %p55 = por %p53, %p54
    %p56 = scmp.ne.s32.totalorder %s48, %s51
    %p57 = scmp.eq.s32.totalorder %s12, 0
    %p58 = por %p56, %p57
    %p59 = scmp.ne.s32.totalorder %s48, %s51
    %p60 = scmp.eq.s32.totalorder %s17, 1
    %p61 = por %p59, %p60
    %p62 = scmp.ne.s32.totalorder %s51, %s52
    %p63 = scmp.eq.s32.totalorder %s17, 0
    %p64 = por %p62, %p63
    %p65 = scmp.ne.s32.totalorder %s51, %s52
    %p66 = scmp.eq.s32.totalorder %s18, 1
    %p67 = por %p65, %p66
    %p69 = scmp.ne.s32.totalorder %s52, %s68
    %p70 = scmp.eq.s32.totalorder %s18, 0
    %p71 = por %p69, %p70
    %s73 = sadd.s32 %s72, 1
    %p76 = scmp.eq.s32.totalorder %s12, 1
    %p77 = scmp.ne.s32.totalorder %s72, %s74
    %p78 = scmp.eq.s32.totalorder %s12, 0
    %p79 = por %p77, %p78
    %p80 = scmp.ne.s32.totalorder %s72, %s74
    %p81 = scmp.eq.s32.totalorder %s17, 1
    %p82 = por %p80, %p81
    %p83 = scmp.ne.s32.totalorder %s74, %s75
    %p84 = scmp.eq.s32.totalorder %s17, 0
    %p85 = por %p83, %p84
    %p86 = scmp.ne.s32.totalorder %s74, %s75
    %p87 = scmp.eq.s32.totalorder %s18, 1
    %p88 = por %p86, %p87
    %p90 = scmp.ne.s32.totalorder %s75, %s89
    %p91 = scmp.eq.s32.totalorder %s18, 0
    %p92 = por %p90, %p91
    %s94 = sadd.s32 %s93, 1
    %p97 = scmp.eq.s32.totalorder %s12, 1
    %p98 = scmp.ne.s32.totalorder %s93, %s95
    %p99 = scmp.eq.s32.totalorder %s12, 0
    %p100 = por %p98, %p99
    %p101 = scmp.ne.s32.totalorder %s93, %s95
    %p102 = scmp.eq.s32.totalorder %s17, 1
    %p103 = por %p101, %p102
    %p104 = scmp.ne.s32.totalorder %s95, %s96
    %p105 = scmp.eq.s32.totalorder %s17, 0
    %p106 = por %p104, %p105
    %p107 = scmp.ne.s32.totalorder %s95, %s96
    %p108 = scmp.eq.s32.totalorder %s18, 1
    %p109 = por %p107, %p108
    %p111 = scmp.ne.s32.totalorder %s96, %s110
    %p112 = scmp.eq.s32.totalorder %s18, 0
    %p113 = por %p111, %p112
    %s115 = sadd.s32 %s114, 1
    %p118 = scmp.eq.s32.totalorder %s12, 1
    %p119 = scmp.ne.s32.totalorder %s114, %s116
    %p120 = scmp.eq.s32.totalorder %s12, 0
    %p121 = por %p119, %p120
    %p122 = scmp.ne.s32.totalorder %s114, %s116
    %p123 = scmp.eq.s32.totalorder %s17, 1
    %p124 = por %p122, %p123
    %p125 = scmp.ne.s32.totalorder %s116, %s117
    %p126 = scmp.eq.s32.totalorder %s17, 0
    %p127 = por %p125, %p126
    %p128 = scmp.ne.s32.totalorder %s116, %s117
    %p129 = scmp.eq.s32.totalorder %s18, 1
    %p130 = por %p128, %p129
    %p132 = scmp.ne.s32.totalorder %s117, %s131
    %p133 = scmp.eq.s32.totalorder %s18, 0
    %p134 = por %p132, %p133
    %s136 = sadd.s32 %s135, 1
    %p139 = scmp.eq.s32.totalorder %s12, 1
    %p140 = scmp.ne.s32.totalorder %s135, %s137
    %p141 = scmp.eq.s32.totalorder %s12, 0
    %p142 = por %p140, %p141
    %p143 = scmp.ne.s32.totalorder %s135, %s137
    %p144 = scmp.eq.s32.totalorder %s17, 1
    %p145 = por %p143, %p144
    %p146 = scmp.ne.s32.totalorder %s137, %s138
    %p147 = scmp.eq.s32.totalorder %s17, 0
    %p148 = por %p146, %p147
    %p149 = scmp.ne.s32.totalorder %s137, %s138
    %p150 = scmp.eq.s32.totalorder %s18, 1
    %p151 = por %p149, %p150
    %p153 = scmp.ne.s32.totalorder %s138, %s152
    %p154 = scmp.eq.s32.totalorder %s18, 0
    %p155 = por %p153, %p154
    %s156 = ssub.s32 %s12, %s19
    %p157 = scmp.eq.s32.totalorder %s156, 0
    %s159 = sadd.s32 %s158, 1
    %s160 = scalar_select %p157, %s158, %s159
    %p163 = pneg %p157
    %p164 = scmp.eq.s32.totalorder %s12, 1
    %p165 = por %p163, %p164
    %p166 = scmp.ne.s32.totalorder %s158, %s161
    %p167 = scmp.eq.s32.totalorder %s12, 0
    %p168 = por %p166, %p167
    %p169 = scmp.ne.s32.totalorder %s158, %s161
    %p170 = scmp.eq.s32.totalorder %s17, 1
    %p171 = por %p169, %p170
    %p172 = scmp.ne.s32.totalorder %s161, %s162
    %p173 = scmp.eq.s32.totalorder %s17, 0
    %p174 = por %p172, %p173
    %p175 = scmp.ne.s32.totalorder %s161, %s162
    %p176 = scmp.eq.s32.totalorder %s18, 1
    %p177 = por %p175, %p176
    %p179 = scmp.ne.s32.totalorder %s162, %s178
    %p180 = scmp.eq.s32.totalorder %s18, 0
    %p181 = por %p179, %p180
    %p182 = scmp.le.s32.totalorder 1, %s12
    %p183 = scmp.lt.s32.totalorder %s12, 3
    %p184 = pnand %p182, %p183
    %p185 = pneg %p184
    // Predicated region
    $region9: #{tpu_custom_call.1} parent=5 // pred_check
      _
    $region10: #{tpu_custom_call.1} parent=5 // pred_check_branch
      %187 = sbr.rel (%p184) target = $region12
    $region11: #{tpu_custom_call.1} parent=5 // pred_region
      %s188 = ssub.s32 %s12, 1
      // Predicated region
      $region13: #{tpu_custom_call.1} parent=11 // pred_check
        %p189 = pneg %p85
      $region14: #{tpu_custom_call.1} parent=11 // pred_check_branch
        %191 = sbr.rel (%p189) target = $region16
      $region15: #{tpu_custom_call.1} parent=11 // pred_region
        _
      $region16: #{tpu_custom_call.1} parent=11 // pred_fallthru
        _
      // Predicated region
      $region17: #{tpu_custom_call.1} parent=11 // pred_check
        %p192 = pneg %p106
      $region18: #{tpu_custom_call.1} parent=11 // pred_check_branch
        %194 = sbr.rel (%p192) target = $region20
      $region19: #{tpu_custom_call.1} parent=11 // pred_region
        _
      $region20: #{tpu_custom_call.1} parent=11 // pred_fallthru
        _
      // Predicated region
      $region21: #{tpu_custom_call.1} parent=11 // pred_check
        %p195 = pneg %p127
      $region22: #{tpu_custom_call.1} parent=11 // pred_check_branch
        %197 = sbr.rel (%p195) target = $region24
      $region23: #{tpu_custom_call.1} parent=11 // pred_region
        _
      $region24: #{tpu_custom_call.1} parent=11 // pred_fallthru
        _
      // Predicated region
      $region25: #{tpu_custom_call.1} parent=11 // pred_check
        %p198 = pneg %p148
      $region26: #{tpu_custom_call.1} parent=11 // pred_check_branch
        %200 = sbr.rel (%p198) target = $region28
      $region27: #{tpu_custom_call.1} parent=11 // pred_region
        _
      $region28: #{tpu_custom_call.1} parent=11 // pred_fallthru
        _
    $region12: #{tpu_custom_call.1} parent=5 // pred_fallthru
      _
    %p201 = scmp.lt.s32.totalorder %s12, 2
    // Predicated region
    $region29: #{tpu_custom_call.1} parent=5 // pred_check
      %p202 = pneg %p201
    $region30: #{tpu_custom_call.1} parent=5 // pred_check_branch
      %204 = sbr.rel (%p202) target = $region32
    $region31: #{tpu_custom_call.1} parent=5 // pred_region
      // Predicated region
      $region33: #{tpu_custom_call.1} parent=31 // pred_check
        %p205 = pneg %p32
      $region34: #{tpu_custom_call.1} parent=31 // pred_check_branch
        %207 = sbr.rel (%p205) target = $region36
      $region35: #{tpu_custom_call.1} parent=31 // pred_region
        %s208 = smul.u32 8, %s12
        %p209 = scmp.lt.s32.totalorder %s208, 15
        %s210 = scalar_select %p209, %s208, 15
        %s211 = smul.addr %s210, 8
        %s212 = scalar_lea.vmem %s0, %s211
        %s213 = smul.u32 8, %s12
      $region36: #{tpu_custom_call.1} parent=31 // pred_fallthru
        _
      // Predicated region
      $region37: #{tpu_custom_call.1} parent=31 // pred_check
        %p214 = pneg %p58
      $region38: #{tpu_custom_call.1} parent=31 // pred_check_branch
        %216 = sbr.rel (%p214) target = $region40
      $region39: #{tpu_custom_call.1} parent=31 // pred_region
        %p217 = scmp.lt.s32.totalorder %s12, 1
        %s218 = scalar_select %p217, %s12, 1
        %s219 = smul.addr %s218, 8
        %s220 = scalar_lea.vmem %s1, %s219
      $region40: #{tpu_custom_call.1} parent=31 // pred_fallthru
        _
    $region32: #{tpu_custom_call.1} parent=5 // pred_fallthru
      _
    %p221 = scmp.le.s32.totalorder 1, %s12
    %p222 = scmp.lt.s32.totalorder %s12, 3
    %p223 = pnand %p221, %p222
    %p224 = pneg %p223
    // Predicated region
    $region41: #{tpu_custom_call.1} parent=5 // pred_check
      _
    $region42: #{tpu_custom_call.1} parent=5 // pred_check_branch
      %226 = sbr.rel (%p223) target = $region44
    $region43: #{tpu_custom_call.1} parent=5 // pred_region
      %s227 = ssub.s32 %s12, 1
      %s228 = smul.u32 8, %s17
      %p229 = scmp.lt.s32.totalorder %s228, 15
      %s230 = scalar_select %p229, %s228, 15
      %s231 = smul.addr %s230, 8
      %s232 = scalar_lea.vmem %s0, %s231
      %p233 = pneg %p38
      %p234 = pneg %p35
      %p235 = scmp.lt.s32.totalorder %s17, 1
      %s236 = scalar_select %p235, %s17, 1
      %s237 = smul.addr %s236, 8
      %s238 = scalar_lea.vmem %s1, %s237
      %p239 = pneg %p64
      %p240 = pneg %p61
      %p241 = pneg %p85
      %p242 = pneg %p82
      %p243 = pneg %p106
      %p244 = pneg %p103
      %p245 = pneg %p127
      %p246 = pneg %p124
      %p247 = pneg %p148
      %p248 = pneg %p145
      %p249 = pneg %p174
      %p250 = pneg %p171
      %p251 = scmp.lt.s32.totalorder %s17, 1
      %s252 = scalar_select %p251, %s17, 1
      %s253 = smul.addr %s252, 8
      %s254 = scalar_lea.vmem %s6, %s253
      %s255 = smul.u32 8, %s17
      %p256 = scmp.lt.s32.totalorder %s255, 15
      %s257 = scalar_select %p256, %s255, 15
      %s258 = smul.addr %s257, 8
      %s259 = scalar_lea.vmem %s0, %s258
      %s260 = smul.u32 8, %s17
      %p261 = scmp.lt.s32.totalorder %s17, 1
      %s262 = scalar_select %p261, %s17, 1
      %s263 = smul.addr %s262, 8
      %s264 = scalar_lea.vmem %s1, %s263
      %p265 = scmp.lt.s32.totalorder %s17, 1
      %s266 = scalar_select %p265, %s17, 1
      %s267 = smul.addr %s266, 8
      %s268 = scalar_lea.vmem %s6, %s267
      %v270 = vld [vmem:[%s259] sm:$0xff]
      %v271 = vld [vmem:[%s259 + $0x8] sm:$0xff]
      %v272 = vld [vmem:[%s259 + $0x10] sm:$0xff]
      %v273 = vld [vmem:[%s259 + $0x18] sm:$0xff]
      %v274 = vld [vmem:[%s259 + $0x20] sm:$0xff]
      %v275 = vld [vmem:[%s259 + $0x28] sm:$0xff]
      %v276 = vld [vmem:[%s259 + $0x30] sm:$0xff]
      %v277 = vld [vmem:[%s259 + $0x38] sm:$0xff]
      %v278 = vpack.c.bf16 %v271, %v270
      %v279 = vpack.c.bf16 %v273, %v272
      %v280 = vpack.c.bf16 %v275, %v274
      %v281 = vpack.c.bf16 %v277, %v276
      %v282 = vld [vmem:[%s2] sm:$0xff]
      %v283 = vld [vmem:[%s2 + $0x8] sm:$0xff]
      %v284 = vld [vmem:[%s2 + $0x10] sm:$0xff]
      %v285 = vld [vmem:[%s2 + $0x18] sm:$0xff]
      %v286 = vpack.c.bf16 %v283, %v282
      %v287 = vpack.c.bf16 %v285, %v284
      %v288 = vld [vmem:[%s264] sm:$0xff]
      %v289 = vpack.c.bf16 %v288, %v288
      %v290 = vld [vmem:[%s3] sm:$0xff]
      %v291 = vld [vmem:[%s3 + $0x8] sm:$0xff]
      %v292 = vpack.c.bf16 %v291, %v290
      %v293 = vld [vmem:[%s4] sm:$0x1]
      %v295 = vlaneseq
      %v296 = vshrl.u32 %v295, 7
      %v297 = vsub.s32 0, %v296
      %v298 = vrot.slane %v293, %v297
      %vm300 = vcmask 130048
      %v302 = vsel %vm300, %v289, 0
      %304 = vmatprep.subr.bf16.mxu0 0
      %305 = vmatpush1.bf16.msra.mxu0 %v292
      %306 = vmatprep.subr.bf16.mxu0 0
      %307 = vmatpush1.bf16.msra.mxu0 0
      %308 = vmatprep.subr.bf16.mxu0 0
      %309 = vmatpush1.bf16.msra.mxu0 0
      %310 = vmatprep.subr.bf16.mxu0 0
      %311 = vmatpush1.bf16.msra.mxu0 0
      %312 = vmatprep.subr.bf16.mxu0 0
      %313 = vmatpush1.bf16.msra.mxu0 0
      %314 = vmatprep.subr.bf16.mxu0 0
      %315 = vmatpush1.bf16.msra.mxu0 0
      %316 = vmatprep.subr.bf16.mxu0 0
      %317 = vmatpush1.bf16.msra.mxu0 0
      %318 = vmatprep.subr.bf16.mxu0 0
      %319 = vmatpush1.bf16.msra.mxu0 0
      %320 = vmatprep.subr.bf16.mxu0 0
      %321 = vmatpush1.bf16.msra.mxu0 0
      %322 = vmatprep.subr.bf16.mxu0 0
      %323 = vmatpush1.bf16.msra.mxu0 0
      %324 = vmatprep.subr.bf16.mxu0 0
      %325 = vmatpush1.bf16.msra.mxu0 0
      %326 = vmatprep.subr.bf16.mxu0 0
      %327 = vmatpush1.bf16.msra.mxu0 0
      %328 = vmatprep.subr.bf16.mxu0 0
      %329 = vmatpush1.bf16.msra.mxu0 0
      %330 = vmatprep.subr.bf16.mxu0 0
      %331 = vmatpush1.bf16.msra.mxu0 0
      %332 = vmatprep.subr.bf16.mxu0 0
      %333 = vmatpush1.bf16.msra.mxu0 0
      %334 = vmatprep.subr.bf16.mxu0 0
      %335 = vmatpush1.bf16.msra.mxu0 0
      %336 = vmatprep.mubr.bf16.mxu0 0
      %337 = vmatmul.mubr.bf16.gmra.mrb[0].mxu0 %v302
      %v338 = vpop.f32.mrb[0].mxu0
      %v339 = vadd.f32 %v298, %v338
      %v340 = vpop.f32.mrb[0].mxu0
      %v341 = vpop.f32.mrb[0].mxu0
      %v342 = vpop.f32.mrb[0].mxu0
      %343 = vdwg.mxu0
      %v345 = vcombine.high %v339, %v339
      %v347 = vunpack.c.l.s4 1966171168
      %v348 = vunpack.c.0.s8 %v347
      %v349 = vlaneseq
      %v350 = vshrl.u32 %v349, 7
      %v351 = vsub.s32 %v348, %v350
      %v352 = vrot.slane %v339, %v351
      %v354 = vunpack.c.l.s4 1966171168
      %v355 = vunpack.c.0.s8 %v354
      %v356 = vlaneseq
      %v357 = vshrl.u32 %v356, 7
      %v358 = vsub.s32 %v355, %v357
      %v359 = vrot.slane %v345, %v358
      %v360 = vcombine.high %v352, %v352
      %v361 = vcombine.high %v359, %v359
      %v363 = vunpack.c.l.s4 1966171168
      %v364 = vunpack.c.0.s8 %v363
      %v365 = vlaneseq
      %v366 = vshrl.u32 %v365, 7
      %v367 = vsub.s32 %v364, %v366
      %v368 = vrot.slane %v352, %v367
      %v370 = vunpack.c.l.s4 1966171168
      %v371 = vunpack.c.0.s8 %v370
      %v372 = vlaneseq
      %v373 = vshrl.u32 %v372, 7
      %v374 = vsub.s32 %v371, %v373
      %v375 = vrot.slane %v359, %v374
      %v377 = vunpack.c.l.s4 1966171168
      %v378 = vunpack.c.0.s8 %v377
      %v379 = vlaneseq
      %v380 = vshrl.u32 %v379, 7
      %v381 = vsub.s32 %v378, %v380
      %v382 = vrot.slane %v360, %v381
      %v384 = vunpack.c.l.s4 1966171168
      %v385 = vunpack.c.0.s8 %v384
      %v386 = vlaneseq
      %v387 = vshrl.u32 %v386, 7
      %v388 = vsub.s32 %v385, %v387
      %v389 = vrot.slane %v361, %v388
      %v390 = vcombine.high %v368, %v368
      %v391 = vcombine.high %v375, %v375
      %v392 = vcombine.high %v382, %v382
      %v393 = vcombine.high %v389, %v389
      %v394 = vlaneseq
      %v395 = vshrl.u32 %v394, 7
      %v396 = vsub.s32 0, %v395
      %v397 = vrot.slane %v368, %v396
      %v398 = vlaneseq
      %v399 = vshrl.u32 %v398, 7
      %v400 = vsub.s32 0, %v399
      %v401 = vrot.slane %v382, %v400
      %v402 = vlaneseq
      %v403 = vshrl.u32 %v402, 7
      %v404 = vsub.s32 0, %v403
      %v405 = vrot.slane %v390, %v404
      %v406 = vlaneseq
      %v407 = vshrl.u32 %v406, 7
      %v408 = vsub.s32 0, %v407
      %v409 = vrot.slane %v392, %v408
      %v410 = vlaneseq
      %v411 = vshrl.u32 %v410, 7
      %v412 = vsub.s32 0, %v411
      %v413 = vrot.slane %v375, %v412
      %v414 = vlaneseq
      %v415 = vshrl.u32 %v414, 7
      %v416 = vsub.s32 0, %v415
      %v417 = vrot.slane %v389, %v416
      %v418 = vlaneseq
      %v419 = vshrl.u32 %v418, 7
      %v420 = vsub.s32 0, %v419
      %v421 = vrot.slane %v391, %v420
      %v422 = vlaneseq
      %v423 = vshrl.u32 %v422, 7
      %v424 = vsub.s32 0, %v423
      %v425 = vrot.slane %v393, %v424
      %vm434 = vcmask 261120
      %v436 = vsel %vm434, %v278, 0
      %v439 = vsel %vm434, %v279, 0
      %v442 = vsel %vm434, %v280, 0
      %v445 = vsel %vm434, %v281, 0
      %447 = vmatprep.subr.bf16.mxu0 0
      %448 = vmatpush1.bf16.msra.mxu0 %v286
      %449 = vmatprep.subr.bf16.mxu0 0
      %450 = vmatpush1.bf16.msra.mxu0 %v287
      %451 = vmatprep.subr.bf16.mxu0 0
      %452 = vmatpush1.bf16.msra.mxu0 0
      %453 = vmatprep.subr.bf16.mxu0 0
      %454 = vmatpush1.bf16.msra.mxu0 0
      %455 = vmatprep.subr.bf16.mxu0 0
      %456 = vmatpush1.bf16.msra.mxu0 0
      %457 = vmatprep.subr.bf16.mxu0 0
      %458 = vmatpush1.bf16.msra.mxu0 0
      %459 = vmatprep.subr.bf16.mxu0 0
      %460 = vmatpush1.bf16.msra.mxu0 0
      %461 = vmatprep.subr.bf16.mxu0 0
      %462 = vmatpush1.bf16.msra.mxu0 0
      %463 = vmatprep.subr.bf16.mxu0 0
      %464 = vmatpush1.bf16.msra.mxu0 0
      %465 = vmatprep.subr.bf16.mxu0 0
      %466 = vmatpush1.bf16.msra.mxu0 0
      %467 = vmatprep.subr.bf16.mxu0 0
      %468 = vmatpush1.bf16.msra.mxu0 0
      %469 = vmatprep.subr.bf16.mxu0 0
      %470 = vmatpush1.bf16.msra.mxu0 0
      %471 = vmatprep.subr.bf16.mxu0 0
      %472 = vmatpush1.bf16.msra.mxu0 0
      %473 = vmatprep.subr.bf16.mxu0 0
      %474 = vmatpush1.bf16.msra.mxu0 0
      %475 = vmatprep.subr.bf16.mxu0 0
      %476 = vmatpush1.bf16.msra.mxu0 0
      %477 = vmatprep.subr.bf16.mxu0 0
      %478 = vmatpush1.bf16.msra.mxu0 0
      %479 = vmatprep.mubr.bf16.mxu0 0
      %480 = vmatmul.mubr.bf16.gmra.mrb[0].mxu0 %v436
      %v481 = vpop.f32.mrb[0].mxu0
      %v482 = vadd.f32 %v397, %v481
      %v483 = vpop.f32.mrb[0].mxu0
      %v484 = vpop.f32.mrb[0].mxu0
      %v485 = vadd.f32 %v401, %v484
      %v486 = vpop.f32.mrb[0].mxu0
      %487 = vmatprep.mubr.bf16.mxu0 0
      %488 = vmatmul.mubr.bf16.gmra.mrb[0].mxu0 %v439
      %v489 = vpop.f32.mrb[0].mxu0
      %v490 = vadd.f32 %v405, %v489
      %v491 = vpop.f32.mrb[0].mxu0
      %v492 = vpop.f32.mrb[0].mxu0
      %v493 = vadd.f32 %v409, %v492
      %v494 = vpop.f32.mrb[0].mxu0
      %495 = vmatprep.mubr.bf16.mxu0 0
      %496 = vmatmul.mubr.bf16.gmra.mrb[0].mxu0 %v442
      %v497 = vpop.f32.mrb[0].mxu0
      %v498 = vadd.f32 %v413, %v497
      %v499 = vpop.f32.mrb[0].mxu0
      %v500 = vpop.f32.mrb[0].mxu0
      %v501 = vadd.f32 %v417, %v500
      %v502 = vpop.f32.mrb[0].mxu0
      %503 = vmatprep.mubr.bf16.mxu0 0
      %504 = vmatmul.mubr.bf16.gmra.mrb[0].mxu0 %v445
      %v505 = vpop.f32.mrb[0].mxu0
      %v506 = vadd.f32 %v421, %v505
      %v507 = vpop.f32.mrb[0].mxu0
      %v508 = vpop.f32.mrb[0].mxu0
      %v509 = vadd.f32 %v425, %v508
      %v510 = vpop.f32.mrb[0].mxu0
      %511 = vdwg.mxu0
      %v512 = vmax.f32 %v482, 0.0
      %v513 = vmax.f32 %v485, 0.0
      %v514 = vmax.f32 %v490, 0.0
      %v515 = vmax.f32 %v493, 0.0
      %v516 = vmax.f32 %v498, 0.0
      %v517 = vmax.f32 %v501, 0.0
      %v518 = vmax.f32 %v506, 0.0
      %v519 = vmax.f32 %v509, 0.0
      %v520 = vld [vmem:[%s5] sm:$0x1]
      %v522 = vlaneseq
      %v523 = vshrl.u32 %v522, 7
      %v524 = vsub.s32 0, %v523
      %v525 = vrot.slane %v520, %v524
      %v527 = vmul.f32 %v512, %v525
      %v528 = vmul.f32 %v513, %v525
      %v529 = vmul.f32 %v514, %v525
      %v530 = vmul.f32 %v515, %v525
      %v531 = vmul.f32 %v516, %v525
      %v532 = vmul.f32 %v517, %v525
      %v533 = vmul.f32 %v518, %v525
      %v534 = vmul.f32 %v519, %v525
      %v535 = vsel %vm434, %v527, 0.0
      %536 = vadd.xlane.f32.xlu0 %v535
      %v537 = vpop.xlane.xlu0 %536
      %v538 = vsel %vm434, %v528, 0.0
      %539 = vadd.xlane.f32.xlu0 %v538
      %v540 = vpop.xlane.xlu0 %539
      %v541 = vsel %vm434, %v529, 0.0
      %542 = vadd.xlane.f32.xlu0 %v541
      %v543 = vpop.xlane.xlu0 %542
      %v544 = vsel %vm434, %v530, 0.0
      %545 = vadd.xlane.f32.xlu0 %v544
      %v546 = vpop.xlane.xlu0 %545
      %v547 = vsel %vm434, %v531, 0.0
      %548 = vadd.xlane.f32.xlu0 %v547
      %v549 = vpop.xlane.xlu0 %548
      %v550 = vsel %vm434, %v532, 0.0
      %551 = vadd.xlane.f32.xlu0 %v550
      %v552 = vpop.xlane.xlu0 %551
      %v553 = vsel %vm434, %v533, 0.0
      %554 = vadd.xlane.f32.xlu0 %v553
      %v555 = vpop.xlane.xlu0 %554
      %v556 = vsel %vm434, %v534, 0.0
      %557 = vadd.xlane.f32.xlu0 %v556
      %v558 = vpop.xlane.xlu0 %557
      %v567 = vlaneseq
      %v568 = vand.u32 %v567, 127
      %v569 = vlaneseq
      %v570 = vshrl.u32 %v569, 7
      %v571 = vsub.s32 %v568, %v570
      %v572 = vrot.slane %v537, %v571
      %v573 = vlaneseq
      %v574 = vshrl.u32 %v573, 7
      %v575 = vsub.s32 %v568, %v574
      %v576 = vrot.slane %v540, %v575
      %v577 = vlaneseq
      %v578 = vshrl.u32 %v577, 7
      %v579 = vsub.s32 %v568, %v578
      %v580 = vrot.slane %v543, %v579
      %v581 = vlaneseq
      %v582 = vshrl.u32 %v581, 7
      %v583 = vsub.s32 %v568, %v582
      %v584 = vrot.slane %v546, %v583
      %v585 = vlaneseq
      %v586 = vshrl.u32 %v585, 7
      %v587 = vsub.s32 %v568, %v586
      %v588 = vrot.slane %v549, %v587
      %v589 = vlaneseq
      %v590 = vshrl.u32 %v589, 7
      %v591 = vsub.s32 %v568, %v590
      %v592 = vrot.slane %v552, %v591
      %v593 = vlaneseq
      %v594 = vshrl.u32 %v593, 7
      %v595 = vsub.s32 %v568, %v594
      %v596 = vrot.slane %v555, %v595
      %v597 = vlaneseq
      %v598 = vshrl.u32 %v597, 7
      %v599 = vsub.s32 %v568, %v598
      %v600 = vrot.slane %v558, %v599
      %vm601 = vcmask 1041409
      %v602 = vsel %vm601, %v576, %v572
      %vm603 = vcmask 1042434
      %v604 = vsel %vm603, %v580, %v602
      %vm605 = vcmask 1043459
      %v606 = vsel %vm605, %v584, %v604
      %vm607 = vcmask 1044484
      %v608 = vsel %vm607, %v588, %v606
      %vm609 = vcmask 1045509
      %v610 = vsel %vm609, %v592, %v608
      %vm611 = vcmask 1046534
      %v612 = vsel %vm611, %v596, %v610
      %vm613 = vcmask 1047559
      %v614 = vsel %vm613, %v600, %v612
      %vm616 = vcmask 64512
      %v617 = vsel %vm616, %v614, -inf
      %618 = vmax.xlane.f32.xlu0 %v617
      %v619 = vpop.xlane.xlu0 %618
      %v621 = vlaneseq
      %v622 = vshrl.u32 %v621, 7
      %v623 = vsub.s32 0, %v622
      %v624 = vrot.slane %v619, %v623
      %v625 = vlaneseq
      %v626 = vshrl.u32 %v625, 7
      %v627 = vsub.s32 1, %v626
      %v628 = vrot.slane %v619, %v627
      %v629 = vlaneseq
      %v630 = vshrl.u32 %v629, 7
      %v631 = vsub.s32 2, %v630
      %v632 = vrot.slane %v619, %v631
      %v633 = vlaneseq
      %v634 = vshrl.u32 %v633, 7
      %v635 = vsub.s32 3, %v634
      %v636 = vrot.slane %v619, %v635
      %v637 = vlaneseq
      %v638 = vshrl.u32 %v637, 7
      %v639 = vsub.s32 4, %v638
      %v640 = vrot.slane %v619, %v639
      %v641 = vlaneseq
      %v642 = vshrl.u32 %v641, 7
      %v643 = vsub.s32 5, %v642
      %v644 = vrot.slane %v619, %v643
      %v645 = vlaneseq
      %v646 = vshrl.u32 %v645, 7
      %v647 = vsub.s32 6, %v646
      %v648 = vrot.slane %v619, %v647
      %v649 = vlaneseq
      %v650 = vshrl.u32 %v649, 7
      %v651 = vsub.s32 7, %v650
      %v652 = vrot.slane %v619, %v651
      %v661 = vsub.f32 %v537, %v624
      %v662 = vsub.f32 %v540, %v628
      %v663 = vsub.f32 %v543, %v632
      %v664 = vsub.f32 %v546, %v636
      %v665 = vsub.f32 %v549, %v640
      %v666 = vsub.f32 %v552, %v644
      %v667 = vsub.f32 %v555, %v648
      %v668 = vsub.f32 %v558, %v652
      %v669 = vmul.f32 %v661, 1.442695
      %v670 = vpow.pop %v669
      %v671 = vmul.f32 %v662, 1.442695
      %v672 = vpow.pop %v671
      %v673 = vmul.f32 %v663, 1.442695
      %v674 = vpow.pop %v673
      %v675 = vmul.f32 %v664, 1.442695
      %v676 = vpow.pop %v675
      %v677 = vmul.f32 %v665, 1.442695
      %v678 = vpow.pop %v677
      %v679 = vmul.f32 %v666, 1.442695
      %v680 = vpow.pop %v679
      %v681 = vmul.f32 %v667, 1.442695
      %v682 = vpow.pop %v681
      %v683 = vmul.f32 %v668, 1.442695
      %v684 = vpow.pop %v683
      %693 = vset.pattern.permute.xlu0 0
      %694 = vperm.xlu0 %693, %v670
      %v695 = vpop.permute.xlu0 %694
      %696 = vset.pattern.permute.xlu0 0
      %697 = vperm.xlu0 %696, %v672
      %v698 = vpop.permute.xlu0 %697
      %699 = vset.pattern.permute.xlu0 0
      %700 = vperm.xlu0 %699, %v674
      %v701 = vpop.permute.xlu0 %700
      %702 = vset.pattern.permute.xlu0 0
      %703 = vperm.xlu0 %702, %v676
      %v704 = vpop.permute.xlu0 %703
      %705 = vset.pattern.permute.xlu0 0
      %706 = vperm.xlu0 %705, %v678
      %v707 = vpop.permute.xlu0 %706
      %708 = vset.pattern.permute.xlu0 0
      %709 = vperm.xlu0 %708, %v680
      %v710 = vpop.permute.xlu0 %709
      %711 = vset.pattern.permute.xlu0 0
      %712 = vperm.xlu0 %711, %v682
      %v713 = vpop.permute.xlu0 %712
      %714 = vset.pattern.permute.xlu0 0
      %715 = vperm.xlu0 %714, %v684
      %v716 = vpop.permute.xlu0 %715
      %v717 = vlaneseq
      %v718 = vshrl.u32 %v717, 7
      %v719 = vsub.s32 %v568, %v718
      %v720 = vrot.slane %v695, %v719
      %v721 = vlaneseq
      %v722 = vshrl.u32 %v721, 7
      %v723 = vsub.s32 %v568, %v722
      %v724 = vrot.slane %v698, %v723
      %v725 = vlaneseq
      %v726 = vshrl.u32 %v725, 7
      %v727 = vsub.s32 %v568, %v726
      %v728 = vrot.slane %v701, %v727
      %v729 = vlaneseq
      %v730 = vshrl.u32 %v729, 7
      %v731 = vsub.s32 %v568, %v730
      %v732 = vrot.slane %v704, %v731
      %v733 = vlaneseq
      %v734 = vshrl.u32 %v733, 7
      %v735 = vsub.s32 %v568, %v734
      %v736 = vrot.slane %v707, %v735
      %v737 = vlaneseq
      %v738 = vshrl.u32 %v737, 7
      %v739 = vsub.s32 %v568, %v738
      %v740 = vrot.slane %v710, %v739
      %v741 = vlaneseq
      %v742 = vshrl.u32 %v741, 7
      %v743 = vsub.s32 %v568, %v742
      %v744 = vrot.slane %v713, %v743
      %v745 = vlaneseq
      %v746 = vshrl.u32 %v745, 7
      %v747 = vsub.s32 %v568, %v746
      %v748 = vrot.slane %v716, %v747
      %v749 = vsel %vm601, %v724, %v720
      %v750 = vsel %vm603, %v728, %v749
      %v751 = vsel %vm605, %v732, %v750
      %v752 = vsel %vm607, %v736, %v751
      %v753 = vsel %vm609, %v740, %v752
      %v754 = vsel %vm611, %v744, %v753
      %v755 = vsel %vm613, %v748, %v754
      %v757 = vsel %vm616, %v755, 0.0
      %758 = vadd.xlane.f32.xlu0 %v757
      %v759 = vpop.xlane.xlu0 %758
      %v761 = vlaneseq
      %v762 = vshrl.u32 %v761, 7
      %v763 = vsub.s32 0, %v762
      %v764 = vrot.slane %v759, %v763
      %v765 = vlaneseq
      %v766 = vshrl.u32 %v765, 7
      %v767 = vsub.s32 1, %v766
      %v768 = vrot.slane %v759, %v767
      %v769 = vlaneseq
      %v770 = vshrl.u32 %v769, 7
      %v771 = vsub.s32 2, %v770
      %v772 = vrot.slane %v759, %v771
      %v773 = vlaneseq
      %v774 = vshrl.u32 %v773, 7
      %v775 = vsub.s32 3, %v774
      %v776 = vrot.slane %v759, %v775
      %v777 = vlaneseq
      %v778 = vshrl.u32 %v777, 7
      %v779 = vsub.s32 4, %v778
      %v780 = vrot.slane %v759, %v779
      %v781 = vlaneseq
      %v782 = vshrl.u32 %v781, 7
      %v783 = vsub.s32 5, %v782
      %v784 = vrot.slane %v759, %v783
      %v785 = vlaneseq
      %v786 = vshrl.u32 %v785, 7
      %v787 = vsub.s32 6, %v786
      %v788 = vrot.slane %v759, %v787
      %v789 = vlaneseq
      %v790 = vshrl.u32 %v789, 7
      %v791 = vsub.s32 7, %v790
      %v792 = vrot.slane %v759, %v791
      %v801 = vrcp.pop %v764
      %v802 = vmul.f32 %v670, %v801
      %v803 = vrcp.pop %v768
      %v804 = vmul.f32 %v672, %v803
      %v805 = vrcp.pop %v772
      %v806 = vmul.f32 %v674, %v805
      %v807 = vrcp.pop %v776
      %v808 = vmul.f32 %v676, %v807
      %v809 = vrcp.pop %v780
      %v810 = vmul.f32 %v678, %v809
      %v811 = vrcp.pop %v784
      %v812 = vmul.f32 %v680, %v811
      %v813 = vrcp.pop %v788
      %v814 = vmul.f32 %v682, %v813
      %v815 = vrcp.pop %v792
      %v816 = vmul.f32 %v684, %v815
      %825 = vset.pattern.permute.xlu0 0
      %826 = vperm.xlu0 %825, %v802
      %v827 = vpop.permute.xlu0 %826
      %828 = vset.pattern.permute.xlu0 0
      %829 = vperm.xlu0 %828, %v804
      %v830 = vpop.permute.xlu0 %829
      %831 = vset.pattern.permute.xlu0 0
      %832 = vperm.xlu0 %831, %v806
      %v833 = vpop.permute.xlu0 %832
      %834 = vset.pattern.permute.xlu0 0
      %835 = vperm.xlu0 %834, %v808
      %v836 = vpop.permute.xlu0 %835
      %837 = vset.pattern.permute.xlu0 0
      %838 = vperm.xlu0 %837, %v810
      %v839 = vpop.permute.xlu0 %838
      %840 = vset.pattern.permute.xlu0 0
      %841 = vperm.xlu0 %840, %v812
      %v842 = vpop.permute.xlu0 %841
      %843 = vset.pattern.permute.xlu0 0
      %844 = vperm.xlu0 %843, %v814
      %v845 = vpop.permute.xlu0 %844
      %846 = vset.pattern.permute.xlu0 0
      %847 = vperm.xlu0 %846, %v816
      %v848 = vpop.permute.xlu0 %847
      %v849 = vlaneseq
      %v850 = vshrl.u32 %v849, 7
      %v851 = vsub.s32 %v568, %v850
      %v852 = vrot.slane %v827, %v851
      %v853 = vlaneseq
      %v854 = vshrl.u32 %v853, 7
      %v855 = vsub.s32 %v568, %v854
      %v856 = vrot.slane %v830, %v855
      %v857 = vlaneseq
      %v858 = vshrl.u32 %v857, 7
      %v859 = vsub.s32 %v568, %v858
      %v860 = vrot.slane %v833, %v859
      %v861 = vlaneseq
      %v862 = vshrl.u32 %v861, 7
      %v863 = vsub.s32 %v568, %v862
      %v864 = vrot.slane %v836, %v863
      %v865 = vlaneseq
      %v866 = vshrl.u32 %v865, 7
      %v867 = vsub.s32 %v568, %v866
      %v868 = vrot.slane %v839, %v867
      %v869 = vlaneseq
      %v870 = vshrl.u32 %v869, 7
      %v871 = vsub.s32 %v568, %v870
      %v872 = vrot.slane %v842, %v871
      %v873 = vlaneseq
      %v874 = vshrl.u32 %v873, 7
      %v875 = vsub.s32 %v568, %v874
      %v876 = vrot.slane %v845, %v875
      %v877 = vlaneseq
      %v878 = vshrl.u32 %v877, 7
      %v879 = vsub.s32 %v568, %v878
      %v880 = vrot.slane %v848, %v879
      %v881 = vsel %vm601, %v856, %v852
      %v882 = vsel %vm603, %v860, %v881
      %v883 = vsel %vm605, %v864, %v882
      %v884 = vsel %vm607, %v868, %v883
      %v885 = vsel %vm609, %v872, %v884
      %v886 = vsel %vm611, %v876, %v885
      %v887 = vsel %vm613, %v880, %v886
      %889 = vst.msk [vmem:[%s268] sm:$0xff] %vm616, %v887
      %p890 = scmp.lt.s32.totalorder %s17, 1
      %s891 = scalar_select %p890, %s17, 1
      %s892 = smul.addr %s891, 8
      %s893 = scalar_lea.vmem %s6, %s892
      // Predicated region
      $region45: #{tpu_custom_call.1} parent=43 // pred_check
        %p894 = pneg %p171
      $region46: #{tpu_custom_call.1} parent=43 // pred_check_branch
        %896 = sbr.rel (%p894) target = $region48
      $region47: #{tpu_custom_call.1} parent=43 // pred_region
        _
      $region48: #{tpu_custom_call.1} parent=43 // pred_fallthru
        _
    $region44: #{tpu_custom_call.1} parent=5 // pred_fallthru
      _
    %p897 = scmp.le.s32.totalorder 2, %s12
    // Predicated region
    $region49: #{tpu_custom_call.1} parent=5 // pred_check
      %p898 = pneg %p897
    $region50: #{tpu_custom_call.1} parent=5 // pred_check_branch
      %900 = sbr.rel (%p898) target = $region52
    $region51: #{tpu_custom_call.1} parent=5 // pred_region
      %s901 = ssub.s32 %s12, 2
      // Predicated region
      $region53: #{tpu_custom_call.1} parent=51 // pred_check
        %p902 = pneg %p177
      $region54: #{tpu_custom_call.1} parent=51 // pred_check_branch
        %904 = sbr.rel (%p902) target = $region56
      $region55: #{tpu_custom_call.1} parent=51 // pred_region
        %p905 = scmp.lt.s32.totalorder %s18, 1
        %s906 = scalar_select %p905, %s18, 1
        %s907 = smul.addr %s906, 8
        %s908 = scalar_lea.vmem %s6, %s907
      $region56: #{tpu_custom_call.1} parent=51 // pred_fallthru
        _
    $region52: #{tpu_custom_call.1} parent=5 // pred_fallthru
      _
  $region6: #{tpu_custom_call.1} parent=0 // loop_footer
    %s16 = sadd.s32 1, %s12
  $region7: #{tpu_custom_call.1} parent=0 // loop_footer_branch
    %11 = sbr.rel target = $region3
  $region8: #{tpu_custom_call.1} parent=0 // loop_exit
    _

</llo_original>
